<compile_context>
chip_gen: v7x
topology: tpu7x:2x2x1
jax: 0.10.0
libtpu: 0.0.40
codegen_flags: <defaults>
</compile_context>

<pallas_src>
import functools
import math

import jax
import jax.numpy as jnp
from jax.experimental import pallas as pl
from jax.experimental.pallas import tpu as pltpu


def _layer_norm_kernel(alpha_ref, bias_ref, x_ref, o_ref, *, eps):
    # x_ref: (tile_rows, d_model) block in VMEM.
    x = x_ref[...].astype(jnp.float32)
    d = x.shape[-1]

    # Two-pass moments: numerically safe (no s2 - n*mean^2 cancellation).
    mean = jnp.sum(x, axis=-1, keepdims=True) / jnp.float32(d)
    xc = x - mean
    # torch.std default is the unbiased estimator (ddof=1).
    var = jnp.sum(xc * xc, axis=-1, keepdims=True) / jnp.float32(d - 1)
    std = jnp.sqrt(var)

    alpha = alpha_ref[0]
    bias = bias_ref[0]
    # Per-row scale/shift on the (tr, 1) column (exact divide keeps
    # bit-closeness to the reference; it is only tr elements), then a single
    # full-tile multiply-add.
    scale = alpha / (std + jnp.float32(eps))
    shift = bias - mean * scale
    o_ref[...] = (x * scale + shift).astype(o_ref.dtype)


def _layer_norm_xla(x, alpha, bias, eps):
    # Plain-XLA fallback for tiny or lane-sparse last dims.
    d = x.shape[-1]
    mean = jnp.mean(x, axis=-1, keepdims=True)
    var = jnp.sum((x - mean) ** 2, axis=-1, keepdims=True) / (d - 1)
    std = jnp.sqrt(var)
    return alpha * (x - mean) / (std + eps) + bias


def _tpu_topology():
    """(vmem_capacity_bytes, num_tensorcores) with safe fallbacks."""
    vmem_cap = 64 * 1024 * 1024
    num_tc = 1
    try:
        info = pltpu.get_tpu_info()
        vmem_cap = int(info.vmem_capacity_bytes)
    except Exception:  # not on TPU / API unavailable at trace time
        pass
    try:
        kind = jax.devices()[0].device_kind.lower()
        if ("v7" in kind) or ("v4" in kind):
            num_tc = 2
    except Exception:
        pass
    return vmem_cap, num_tc


def _sublane_multiple(dtype):
    itemsize = jnp.dtype(dtype).itemsize
    return {4: 8, 2: 16, 1: 32}.get(itemsize, 8)


def layer_normalization(x, alpha, bias, *, eps=1e-6):
    """Layer_Normalization over the last axis of x (any leading dims)."""
    orig_shape = x.shape
    d_model = orig_shape[-1]
    rows = int(math.prod(orig_shape[:-1])) if len(orig_shape) > 1 else 1

    sub = _sublane_multiple(x.dtype)
    # Lane-dense stores only: d_model must be a multiple of 128, and the
    # problem must be big enough to be worth a kernel launch at all.
    if d_model % 128 != 0 or rows < sub:
        return _layer_norm_xla(x, alpha, bias, eps)

    x2d = x.reshape(rows, d_model)
    itemsize = jnp.dtype(x.dtype).itemsize
    bytes_per_row = d_model * itemsize

    vmem_cap, num_tc = _tpu_topology()
    # Leave headroom: ~40 MiB scoped limit on a 64 MiB-VMEM chip (v7x),
    # ~80 MiB on 128 MiB-VMEM chips (v5e/v6e).
    vmem_limit = max(32 * 1024 * 1024, min((vmem_cap * 5) // 8, 80 * 1024 * 1024))
    target_block_bytes = 4 * 1024 * 1024 if vmem_cap <= 64 * 1024 * 1024 \
        else 8 * 1024 * 1024

    # --- Row-tile sizing -----------------------------------------------
    rows_up = pl.cdiv(rows, sub) * sub
    tr = max(sub, min(2048, target_block_bytes // bytes_per_row))
    tr = (tr // sub) * sub
    tr = min(tr, rows_up)

    # VMEM budget: 2x(in) + 2x(out) double buffers + ~3 block-sized f32 temps.
    def _vmem_estimate(t):
        blk = t * d_model
        return blk * itemsize * 4 + blk * 4 * 3

    while tr > sub and _vmem_estimate(tr) > int(vmem_limit * 0.7):
        tr = max(sub, ((tr // 2) // sub) * sub)

    # Multi-TensorCore chips: keep both cores busy and balanced.
    if num_tc > 1:
        min_steps = 2 * num_tc
        if pl.cdiv(rows, tr) < min_steps and rows >= min_steps * sub:
            tr = max(sub, ((rows // min_steps) // sub) * sub)
        steps = pl.cdiv(rows, tr)
        if steps > 1 and steps % num_tc != 0 and tr > sub:
            tr2 = max(sub, (pl.cdiv(pl.cdiv(rows, steps + 1), sub)) * sub)
            if pl.cdiv(rows, tr2) % num_tc == 0:
                tr = tr2

    grid = (pl.cdiv(rows, tr),)
    kernel = functools.partial(_layer_norm_kernel, eps=eps)

    out2d = pl.pallas_call(
        kernel,
        out_shape=jax.ShapeDtypeStruct((rows, d_model), x.dtype),
        grid_spec=pltpu.PrefetchScalarGridSpec(
            num_scalar_prefetch=0,
            grid=grid,
            in_specs=[
                # scalar params alpha, bias live in SMEM
                pl.BlockSpec(memory_space=pltpu.MemorySpace.SMEM),
                pl.BlockSpec(memory_space=pltpu.MemorySpace.SMEM),
                pl.BlockSpec((tr, d_model), lambda i: (i, 0)),
            ],
            out_specs=pl.BlockSpec((tr, d_model), lambda i: (i, 0)),
        ),
        compiler_params=pltpu.CompilerParams(
            dimension_semantics=("parallel",),
            vmem_limit_bytes=int(vmem_limit),
        ),
    )(alpha, bias, x2d)

    return out2d.reshape(orig_shape)


class Encoder:
    """JAX/Pallas port of the PyTorch Encoder module.

    `layers` is a sequence of callables f(x, mask) -> x (glue, plain JAX);
    the final Layer_Normalization runs as a Pallas kernel.
    """

    def __init__(self, layers=(), eps=1e-6):
        self.layers = list(layers)
        self.eps = eps
        # Layer_Normalization parameters: alpha = ones(1), bias = zeros(1)
        self.alpha = jnp.ones((1,), dtype=jnp.float32)
        self.bias = jnp.zeros((1,), dtype=jnp.float32)

    def __call__(self, x, mask):
        for layer in self.layers:
            x = layer(x, mask)
        return layer_normalization(x, self.alpha, self.bias, eps=self.eps)


def _reference_encoder(x, mask, layers, alpha, bias, eps=1e-6):
    for layer in layers:
        x = layer(x, mask)
    mean = jnp.mean(x, axis=-1, keepdims=True)
    # unbiased std, matching torch.std default
    var = jnp.sum((x - mean) ** 2, axis=-1, keepdims=True) / (x.shape[-1] - 1)
    std = jnp.sqrt(var)
    return alpha * (x - mean) / (std + eps) + bias


if __name__ == "__main__":
    key = jax.random.PRNGKey(0)
    batch, seq, d_model = 2, 8, 128   # lane-dense last dim (multiple of 128)

    kx, km = jax.random.split(key)
    x = jax.random.normal(kx, (batch, seq, d_model), dtype=jnp.float32)
    # mask is only consumed by the (externally supplied) encoder layers;
    # it is passed through unchanged here.
    mask = jnp.ones((batch, 1, seq, seq), dtype=jnp.float32)

    # TODO(synk): concrete EncoderBlock layers are supplied externally in the
    # original model; here the layer list is empty so the Encoder reduces to
    # the final Layer_Normalization (the Pallas hot path).
    enc = Encoder(layers=[])

    out = enc(x, mask)
    out = jax.block_until_ready(out)

    ref = _reference_encoder(x, mask, enc.layers, enc.alpha, enc.bias)
    assert out.shape == x.shape
    assert jnp.allclose(out, ref, atol=1e-4, rtol=1e-4), (
        float(jnp.max(jnp.abs(out - ref))))

    print("KERNEL_OK")
</pallas_src>

<mosaic_0001>
module attributes {stable_mosaic.version = 11 : i64} {
  func.func @_layer_norm_kernel(%arg0: i32, %arg1: memref<1xf32, #tpu.memory_space<smem>>, %arg2: memref<1xf32, #tpu.memory_space<smem>>, %arg3: memref<16x128xf32, #tpu.memory_space<vmem>>, %arg4: memref<16x128xf32, #tpu.memory_space<vmem>>) attributes {dimension_semantics = [#tpu.dimension_semantics<parallel>], iteration_bounds = array<i64: 1>, scalar_prefetch = 0 : i64, scratch_operands = 0 : i64, tpu.core_type = #tpu.core_type<tc>, window_params = [{transform_indices = @transform_0, window_bounds = array<i64: 1>}, {transform_indices = @transform_1, window_bounds = array<i64: 1>}, {transform_indices = @transform_2, window_bounds = array<i64: 16, 128>}, {transform_indices = @transform_3, window_bounds = array<i64: 16, 128>}]} {
    %c0 = arith.constant 0 : index
    %c0_0 = arith.constant 0 : index
    %0 = vector.load %arg3[%c0, %c0_0] : memref<16x128xf32, #tpu.memory_space<vmem>>, vector<16x128xf32>
    %cst = arith.constant dense<0.000000e+00> : vector<16xf32>
    %1 = vector.multi_reduction <add>, %0, %cst [1] : vector<16x128xf32> to vector<16xf32>
    %2 = vector.shape_cast %1 : vector<16xf32> to vector<16x1xf32>
    %cst_1 = arith.constant 1.280000e+02 : f32
    %3 = vector.broadcast %cst_1 : f32 to vector<16x1xf32>
    %4 = arith.divf %2, %3 : vector<16x1xf32>
    %5 = vector.broadcast %4 : vector<16x1xf32> to vector<16x128xf32>
    %6 = arith.subf %0, %5 : vector<16x128xf32>
    %7 = arith.mulf %6, %6 : vector<16x128xf32>
    %cst_2 = arith.constant dense<0.000000e+00> : vector<16xf32>
    %8 = vector.multi_reduction <add>, %7, %cst_2 [1] : vector<16x128xf32> to vector<16xf32>
    %9 = vector.shape_cast %8 : vector<16xf32> to vector<16x1xf32>
    %cst_3 = arith.constant 1.270000e+02 : f32
    %10 = vector.broadcast %cst_3 : f32 to vector<16x1xf32>
    %11 = arith.divf %9, %10 : vector<16x1xf32>
    %12 = math.sqrt %11 : vector<16x1xf32>
    %c0_4 = arith.constant 0 : index
    %13 = memref.load %arg1[%c0_4] : memref<1xf32, #tpu.memory_space<smem>>
    %c0_5 = arith.constant 0 : index
    %14 = memref.load %arg2[%c0_5] : memref<1xf32, #tpu.memory_space<smem>>
    %cst_6 = arith.constant 9.99999997E-7 : f32
    %15 = vector.broadcast %cst_6 : f32 to vector<16x1xf32>
    %16 = arith.addf %12, %15 : vector<16x1xf32>
    %17 = vector.broadcast %13 : f32 to vector<16x1xf32>
    %18 = arith.divf %17, %16 : vector<16x1xf32>
    %19 = arith.mulf %4, %18 : vector<16x1xf32>
    %20 = vector.broadcast %14 : f32 to vector<16x1xf32>
    %21 = arith.subf %20, %19 : vector<16x1xf32>
    %22 = vector.broadcast %18 : vector<16x1xf32> to vector<16x128xf32>
    %23 = arith.mulf %0, %22 : vector<16x128xf32>
    %24 = vector.broadcast %21 : vector<16x1xf32> to vector<16x128xf32>
    %25 = arith.addf %23, %24 : vector<16x128xf32>
    %c0_7 = arith.constant 0 : index
    %c0_8 = arith.constant 0 : index
    %26 = vector.load %arg4[%c0_7, %c0_8] : memref<16x128xf32, #tpu.memory_space<vmem>>, vector<16x128xf32>
    tpu.vector_store %arg4[%c0_7, %c0_8], %25 {strides = array<i32>} : memref<16x128xf32, #tpu.memory_space<vmem>>, vector<16x128xf32>,
    return
  }
  func.func @transform_0(%arg0: i32) -> i32 {
    %c0_i32 = arith.constant 0 : i32
    %c0_i32_0 = arith.constant 0 : i32
    return %c0_i32 : i32
  }
  func.func @transform_1(%arg0: i32) -> i32 {
    %c0_i32 = arith.constant 0 : i32
    %c0_i32_0 = arith.constant 0 : i32
    return %c0_i32 : i32
  }
  func.func @transform_2(%arg0: i32) -> (i32, i32) {
    %c0_i32 = arith.constant 0 : i32
    %c0_i32_0 = arith.constant 0 : i32
    return %arg0, %c0_i32 : i32, i32
  }
  func.func @transform_3(%arg0: i32) -> (i32, i32) {
    %c0_i32 = arith.constant 0 : i32
    %c0_i32_0 = arith.constant 0 : i32
    return %arg0, %c0_i32 : i32, i32
  }
}

</mosaic_0001>

<llo_original>
// kernel: tpu_custom_call.1
$region0: #{tpu_custom_call.1}
  #allocation0 [shape = 'u32[]', space=smem, size = 0x4, offset = 0x4, fixed_abs, tag = 'smem constant byte address 0x4 - core index']
  #allocation1 [shape = 'u32[144,128]{1,0:T(1,128)}', space=vmem, size = 0x12000, scoped, tag = 'internal scratch']
  #allocation2 [shape = 'f32[1]{0:T(128)S(6)}', space=smem, size = 0x200, scoped, tag = 'scoped memory for tpu_custom_call.1']
  #allocation3 [shape = 'f32[1]{0:T(128)S(6)}', space=smem, size = 0x200, scoped, tag = 'scoped memory for tpu_custom_call.1']
  %s0 = inlined_call_operand.<no memory space> [shape: f32[1], index: 0, kind: input, shape index: {}]
  %s1 = inlined_call_operand.<no memory space> [shape: f32[1], index: 1, kind: input, shape index: {}]
  %s2 = inlined_call_operand.hbm [shape: f32[16,128], index: 2, kind: input, shape index: {}]
  %s3 = inlined_call_operand.hbm [shape: f32[16,128], index: 3, kind: output, shape index: {}]
  %s4 = sld [smem:[#allocation0]]
  $region26: #{tpu_custom_call.1} parent=0
    _
  %s6 = ssub.s32 1, %s4
  %s7 = scalar_select 0, %s6, %s4
  %8 = sst [smem:[#allocation2]] %s0
  %9 = sst [smem:[#allocation3]] %s1
  $region1: #{tpu_custom_call.1} parent=0
    #allocation4 [shape = 'u8[8192]{0}', space=vmem, size = 0x2000, scoped, tag = 'input window, operand 2, single buffered']
    #allocation5 [shape = 's32[1]{0}', space=sflag, size = 0x4, scoped, tag = 'scoped memory for tpu_custom_call.1']
    #allocation6 [shape = 's32[1]{0}', space=sflag, size = 0x4, scoped, tag = 'scoped memory for tpu_custom_call.1']
    #allocation7 [shape = 'u8[8192]{0}', space=vmem, size = 0x2000, scoped, tag = 'output window, operand 0, single buffered']
    %10 = vsyncpa [#allocation5], 0
    %11 = vsyncpa [#allocation6], 0
    // Predicated region
    $region2: #{tpu_custom_call.1} parent=1 // pred_check
      _
    $region3: #{tpu_custom_call.1} parent=1 // pred_check_branch
      %13 = sbr.rel (0) target = $region5
    $region4: #{tpu_custom_call.1} parent=1 // pred_region
      _
    $region5: #{tpu_custom_call.1} parent=1 // pred_fallthru
      _
    // Predicated region
    $region6: #{tpu_custom_call.1} parent=1 // pred_check
      _
    $region7: #{tpu_custom_call.1} parent=1 // pred_check_branch
      %15 = sbr.rel (0) target = $region9
    $region8: #{tpu_custom_call.1} parent=1 // pred_region
      _
    $region9: #{tpu_custom_call.1} parent=1 // pred_fallthru
      _
    // Predicated region
    $region10: #{tpu_custom_call.1} parent=1 // pred_check
      _
    $region11: #{tpu_custom_call.1} parent=1 // pred_check_branch
      %17 = sbr.rel (0) target = $region13
    $region12: #{tpu_custom_call.1} parent=1 // pred_region
      %s19 = ssub.s32 256, 256
      %20 = vsyncadd [#allocation5], %s19
      %s21 = sshll.u32 [#allocation4], 4
      %s22 = int_to_ptr.vmem [resolvable:$true] %s21
      %27 = dma.hbm_to_vmem [thread:$0]  %s2, 256, %s22, [#allocation5], 128, 128, 8
    $region13: #{tpu_custom_call.1} parent=1 // pred_fallthru
      _
    // Predicated region
    $region14: #{tpu_custom_call.1} parent=1 // pred_check
      _
    $region15: #{tpu_custom_call.1} parent=1 // pred_check_branch
      %29 = sbr.rel (0) target = $region17
    $region16: #{tpu_custom_call.1} parent=1 // pred_region
      %30 = dma.done [#allocation5], 256
    $region17: #{tpu_custom_call.1} parent=1 // pred_fallthru
      _
    %v31 = vld [vmem:[#allocation4] sm:$0xff]
    %v32 = vld [vmem:[#allocation4 + $0x8] sm:$0xff]
    %33 = vadd.xlane.f32.xlu0 %v31
    %v34 = vpop.xlane.xlu0 %33
    %35 = vadd.xlane.f32.xlu0 %v32
    %v36 = vpop.xlane.xlu0 %35
    %v37 = vrcp.pop 128.0
    %v38 = vmul.f32 %v34, %v37
    %v39 = vmul.f32 %v36, %v37
    %v40 = vsub.f32 %v31, %v38
    %v41 = vsub.f32 %v32, %v39
    %v42 = vmul.f32 %v40, %v40
    %v43 = vmul.f32 %v41, %v41
    %44 = vadd.xlane.f32.xlu0 %v42
    %v45 = vpop.xlane.xlu0 %44
    %46 = vadd.xlane.f32.xlu0 %v43
    %v47 = vpop.xlane.xlu0 %46
    %v48 = vrcp.pop 127.0
    %v49 = vmul.f32 %v45, %v48
    %v50 = vmul.f32 %v47, %v48
    %v51 = vrsqrt.pop %v49
    %v52 = vmul.f32 %v49, %v51
    %vm53 = vcmp.eq.f32.partialorder %v49, inf
    %v54 = vsel %vm53, %v49, %v52
    %vm55 = vcmp.eq.f32.partialorder %v49, 0.0
    %v56 = vand.u32 %v49, 2147483648
    %v57 = vsel %vm55, %v56, %v54
    %v58 = vrsqrt.pop %v50
    %v59 = vmul.f32 %v50, %v58
    %vm60 = vcmp.eq.f32.partialorder %v50, inf
    %v61 = vsel %vm60, %v50, %v59
    %vm62 = vcmp.eq.f32.partialorder %v50, 0.0
    %v63 = vand.u32 %v50, 2147483648
    %v64 = vsel %vm62, %v63, %v61
    %s65 = sld [smem:[#allocation2]]
    %s66 = sld [smem:[#allocation3]]
    %v67 = vadd.f32 %v57, 1e-06
    %v68 = vadd.f32 %v64, 1e-06
    %v69 = vstv %s65
    %v70 = vrcp.pop %v67
    %v71 = vmul.f32 %v69, %v70
    %v72 = vrcp.pop %v68
    %v73 = vmul.f32 %v69, %v72
    %v74 = vmul.f32 %v38, %v71
    %v75 = vmul.f32 %v39, %v73
    %v76 = vstv %s66
    %v77 = vsub.f32 %v76, %v74
    %v78 = vsub.f32 %v76, %v75
    %v79 = vmul.f32 %v31, %v71
    %v80 = vmul.f32 %v32, %v73
    %v81 = vadd.f32 %v79, %v77
    %v82 = vadd.f32 %v80, %v78
    %83 = vst [vmem:[#allocation7] sm:$0xff] %v81
    %84 = vst [vmem:[#allocation7 + $0x8] sm:$0xff] %v82
    // Predicated region
    $region18: #{tpu_custom_call.1} parent=1 // pred_check
      _
    $region19: #{tpu_custom_call.1} parent=1 // pred_check_branch
      %86 = sbr.rel (0) target = $region21
    $region20: #{tpu_custom_call.1} parent=1 // pred_region
      %s88 = ssub.s32 256, 256
      %89 = vsyncadd [#allocation6], %s88
      %s90 = sshll.u32 [#allocation7], 4
      %s91 = int_to_ptr.vmem [resolvable:$true] %s90
      %96 = dma.vmem_to_hbm [thread:$0]  %s91, 256, %s3, [#allocation6], 128, 128, 8
    $region21: #{tpu_custom_call.1} parent=1 // pred_fallthru
      _
    // Predicated region
    $region22: #{tpu_custom_call.1} parent=1 // pred_check
      _
    $region23: #{tpu_custom_call.1} parent=1 // pred_check_branch
      %98 = sbr.rel (0) target = $region25
    $region24: #{tpu_custom_call.1} parent=1 // pred_region
      %99 = dma.done [#allocation6], 256
    $region25: #{tpu_custom_call.1} parent=1 // pred_fallthru
      _
    %100 = vsyncpa [#allocation5], 1
    %101 = vsyncpa [#allocation6], 1

</llo_original>
